<compile_context>
chip_gen: v7x
topology: tpu7x:2x2x1
jax: 0.10.0
libtpu: 0.0.40
codegen_flags: <defaults>
</compile_context>

<pallas_src>
import jax
import jax.numpy as jnp
from jax.experimental import pallas as pl
from jax.experimental.pallas import tpu as pltpu


# ---------------------------------------------------------------------------
# Deterministic "parameter" initialization, mirroring Quantization.__init__.
# Carried for fidelity; NOT used by forward (identity).
# ---------------------------------------------------------------------------
def make_quantization_params(bitwidth=8):
    float_bitwidth = jnp.asarray(float(bitwidth), dtype=jnp.float32)   # nn.Parameter
    shadow_bitwidth = jnp.round(float_bitwidth)                        # registered buffer
    return {"float_bitwidth": float_bitwidth, "shadow_bitwidth": shadow_bitwidth}


# ---------------------------------------------------------------------------
# Kernel factory: direct HBM -> HBM DMA copy (no VMEM staging).
#   chunks is None          -> a single DMA of the whole ref.
#   chunks = ((off, sz),..) -> one concurrent DMA per contiguous slice of the
#                              leading axis, each with its own DMA semaphore.
# ---------------------------------------------------------------------------
def _make_hbm_copy_kernel(chunks):
    if chunks is None:
        def kernel(x_hbm, o_hbm, sems):
            cp = pltpu.make_async_copy(x_hbm, o_hbm, sems.at[0])
            cp.start()
            cp.wait()
        return kernel

    def kernel(x_hbm, o_hbm, sems):
        cps = []
        for k, (off, sz) in enumerate(chunks):          # static Python unroll
            cp = pltpu.make_async_copy(
                x_hbm.at[pl.ds(off, sz)],
                o_hbm.at[pl.ds(off, sz)],
                sems.at[k])
            cp.start()
            cps.append(cp)
        for cp in cps:                                   # wait for all in-flight DMAs
            cp.wait()
    return kernel


_DEFAULT_CHUNK_BYTES = 8 * 1024 * 1024   # split into concurrent DMAs above this
_MAX_INFLIGHT = 4                        # max concurrent DMA chunks


def quantization_forward(x, params=None, *, use_kernel=False,
                         chunk_bytes=_DEFAULT_CHUNK_BYTES,
                         max_inflight=_MAX_INFLIGHT):
    """Forward of the base Quantization module: identity.

    Default (use_kernel=False): returns x directly — zero HBM traffic, zero cost.
    use_kernel=True: routes through a Pallas kernel boundary implemented as a
    direct HBM->HBM DMA copy (no VMEM staging, no padding; any shape/dtype).
    """
    if not use_kernel:
        return x                      # the identity is free; don't launch anything

    if x.size == 0:
        return x

    itemsize = jnp.dtype(x.dtype).itemsize
    nbytes = x.size * itemsize

    # Decide on concurrent chunking along the leading axis (static, trace-time).
    if x.ndim == 0 or x.shape[0] < 2 or nbytes <= chunk_bytes:
        chunks = None
        n_sems = 1
    else:
        lead = x.shape[0]
        want = -(-nbytes // chunk_bytes)               # ceil
        n_chunks = max(1, min(max_inflight, lead, want))
        base, rem = divmod(lead, n_chunks)
        chunks, off = [], 0
        for k in range(n_chunks):
            sz = base + (1 if k < rem else 0)
            chunks.append((off, sz))
            off += sz
        chunks = tuple(chunks)
        n_sems = n_chunks

    kernel = _make_hbm_copy_kernel(chunks)

    return pl.pallas_call(
        kernel,
        out_shape=jax.ShapeDtypeStruct(x.shape, x.dtype),
        in_specs=[pl.BlockSpec(memory_space=pl.ANY)],    # stay in HBM, no auto-DMA
        out_specs=pl.BlockSpec(memory_space=pl.ANY),
        scratch_shapes=[pltpu.SemaphoreType.DMA((n_sems,))],
        cost_estimate=pl.CostEstimate(flops=0, transcendentals=0,
                                      bytes_accessed=2 * nbytes),
    )(x)


# TODO(synk): backward surrogates (STE / PWL / PWL_C) and clone_quantizer are
# training/bookkeeping machinery with no effect on the forward value; not lowered.


if __name__ == "__main__":
    key = jax.random.PRNGKey(0)
    params = make_quantization_params(bitwidth=8)

    # 0) Default path: identity is free — no kernel launch, input returned as-is.
    x = jax.random.normal(key, (2, 4, 16, 16), dtype=jnp.float32)
    y_free = quantization_forward(x, params)
    assert y_free is x

    # Kernel-boundary path: direct HBM->HBM DMA copy.
    fwd_kernel = jax.jit(lambda v: quantization_forward(v, params, use_kernel=True))

    # 1) NCHW activation-like input.
    y = jax.block_until_ready(fwd_kernel(x))
    assert y.shape == x.shape and y.dtype == x.dtype
    assert bool(jnp.all(y == x))

    # 2) Odd / unaligned shape (no padding or slicing passes needed anymore).
    x2 = jax.random.normal(jax.random.fold_in(key, 1), (3, 5, 7), dtype=jnp.float32)
    y2 = jax.block_until_ready(fwd_kernel(x2))
    assert y2.shape == x2.shape and bool(jnp.all(y2 == x2))

    # 3) bf16 input (dtype-agnostic DMA path).
    x3 = jax.random.normal(jax.random.fold_in(key, 2), (4, 16, 16), dtype=jnp.bfloat16)
    y3 = jax.block_until_ready(fwd_kernel(x3))
    assert y3.dtype == jnp.bfloat16 and bool(jnp.all(y3 == x3))

    # 4) Force the chunked, multi-DMA concurrent path with a tiny chunk budget.
    x4 = jax.random.normal(jax.random.fold_in(key, 3), (4, 64, 32, 32),
                           dtype=jnp.float32)                       # 1 MiB
    fwd_chunked = jax.jit(lambda v: quantization_forward(
        v, params, use_kernel=True, chunk_bytes=64 * 1024))
    y4 = jax.block_until_ready(fwd_chunked(x4))
    assert bool(jnp.all(y4 == x4))

    print("KERNEL_OK")
</pallas_src>

<mosaic_0001>
module attributes {stable_mosaic.version = 11 : i64} {
  func.func @kernel(%arg0: memref<2x4x16x16xf32, #tpu.memory_space<any>>, %arg1: memref<2x4x16x16xf32, #tpu.memory_space<any>>, %arg2: memref<1x!tpu.dma_semaphore, #tpu.memory_space<semaphore_mem>>) attributes {dimension_semantics = [], scalar_prefetch = 0 : i64, scratch_operands = 1 : i64, tpu.core_type = #tpu.core_type<tc>} {
    %c0_i32 = arith.constant 0 : i32
    %0 = tpu.memref_slice %arg2[%c0_i32] : memref<1x!tpu.dma_semaphore, #tpu.memory_space<semaphore_mem>> -> memref<1x!tpu.dma_semaphore, #tpu.memory_space<semaphore_mem>>
    %1 = tpu.memref_squeeze %0 : memref<1x!tpu.dma_semaphore, #tpu.memory_space<semaphore_mem>> -> memref<!tpu.dma_semaphore, #tpu.memory_space<semaphore_mem>>
    tpu.enqueue_dma source(%arg0 : memref<2x4x16x16xf32, #tpu.memory_space<any>>) target(%arg1 : memref<2x4x16x16xf32, #tpu.memory_space<any>>) target_semaphore(%1 : memref<!tpu.dma_semaphore, #tpu.memory_space<semaphore_mem>>)
    %c0_i32_0 = arith.constant 0 : i32
    %2 = tpu.memref_slice %arg2[%c0_i32_0] : memref<1x!tpu.dma_semaphore, #tpu.memory_space<semaphore_mem>> -> memref<1x!tpu.dma_semaphore, #tpu.memory_space<semaphore_mem>>
    %3 = tpu.memref_squeeze %2 : memref<1x!tpu.dma_semaphore, #tpu.memory_space<semaphore_mem>> -> memref<!tpu.dma_semaphore, #tpu.memory_space<semaphore_mem>>
    tpu.wait_dma2 semaphore(%3 : memref<!tpu.dma_semaphore, #tpu.memory_space<semaphore_mem>>) src(%arg0 : memref<2x4x16x16xf32, #tpu.memory_space<any>>) dst(%arg1 : memref<2x4x16x16xf32, #tpu.memory_space<any>>)
    return
  }
}

</mosaic_0001>

<llo_original>
// kernel: _lambda_.1
$region0: #{_lambda_.1}
  #allocation0 [shape = 'u32[]', space=smem, size = 0x4, offset = 0x4, fixed_abs, tag = 'smem constant byte address 0x4 - core index']
  #allocation1 [shape = 'u32[144,128]{1,0:T(1,128)}', space=vmem, size = 0x12000, scoped, tag = 'internal scratch']
  #allocation2 [shape = 's32[1]{0}', space=sflag, size = 0x4, scoped, tag = 'scratch operand']
  #allocation3 [shape = 's32[]', space=sflag, size = 0x4, offset = 0, fixed_abs, tag = 'sflag constant byte address 0x0 - dummy sync flag']
  #allocation4 [shape = 'u32[0]{0}', space=smem, size = 0, offset = 0, fixed_abs, tag = 'smem constant byte address 0x0 - null']
  %s0 = inlined_call_operand.hbm [shape: f32[2,4,16,16], index: 0, kind: input, shape index: {}]
  %s1 = inlined_call_operand.hbm [shape: f32[2,4,16,16], index: 1, kind: output, shape index: {}]
  %s2 = sld [smem:[#allocation0]]
  $region2: #{_lambda_.1} parent=0
    _
  %s4 = ssub.s32 1, %s2
  %s5 = scalar_select 0, %s4, %s2
  %s7 = sshll.u32 1, 14
  %s8 = sxor.u32 4294967295, %s7
  %s11 = sshll.u32 3, 24
  %s12 = sxor.u32 4294967295, %s11
  %s13 = sand.u32 0, %s12
  %s15 = sor.u32 %s13, 0
  %18 = dma.general %s0, 2048, %s1, [#allocation2], [#allocation3], [#allocation4], %s15, 0
  %s19 = smul.u32 2, 4
  %s20 = smul.u32 %s19, 16
  %s21 = smul.u32 %s20, 1
  %s22 = sshll.u32 %s21, 4
  %23 = dma.done [#allocation2], %s22
  %24 = vsyncmov [#allocation2]
  %s25 = vpop.sfrf %24
  %p26 = scmp.eq.s32.totalorder %s25, 0
  %p27 = pneg %p26
  %29 = shalt.err (%p27)

</llo_original>
